<compile_context>
chip_gen: v7x
topology: tpu7x:2x2x1
jax: 0.10.0
libtpu: 0.0.40
codegen_flags: <defaults>
</compile_context>

<pallas_src>
import jax
import jax.numpy as jnp
from jax.experimental import pallas as pl
from jax.experimental.pallas import tpu as pltpu


def _mlp_head_kernel(x_ref, w1_ref, b1_ref, w2_ref, b2_ref, y_ref):
    # x_ref:  (TM, DIM_IN)        node-feature tile
    # w1_ref: (DIM_IN, DIM_H)     first Linear weight        (grid-constant)
    # b1_ref: (1, DIM_H)          first Linear bias          (grid-constant)
    # w2_ref: (DIM_H, DIM_OUT_P)  second Linear weight, lane-padded to 128
    # b2_ref: (1, DIM_OUT_P)      second Linear bias,   lane-padded to 128
    # y_ref:  (TM, DIM_OUT_P)     prediction tile (lane-dense store)
    h = jnp.dot(x_ref[...], w1_ref[...], preferred_element_type=jnp.float32)
    h = jnp.maximum(h + b1_ref[...], 0.0)                 # bias + ReLU (hidden)
    o = jnp.dot(h.astype(w2_ref.dtype), w2_ref[...],
                preferred_element_type=jnp.float32)
    o = o + b2_ref[...]                                   # final: bias, no act
    y_ref[...] = o.astype(y_ref.dtype)


def _choose_tm(n, dim_in, dim_h, dim_out_p, itemsize, *, tm_max=1024,
               min_steps=4, vmem_budget_bytes=20 * 1024 * 1024):
    """Largest row tile that (a) keeps >= min_steps grid steps so v7x can shard
    rows across its 2 TensorCores and keep double-buffering busy, (b) keeps the
    pipelined x/out tiles + f32 intermediates inside a conservative VMEM budget
    (well under the 32 MiB scoped limit on v6e/v7x, valid on v5e too), and
    (c) is a multiple of 8 sublanes."""
    tm = min(tm_max, max(8, pl.cdiv(n, min_steps)))
    per_row_bytes = (2 * dim_in * itemsize        # double-buffered x tile
                     + 2 * dim_out_p * itemsize   # double-buffered out tile
                     + 4 * dim_h + 4 * dim_out_p)  # f32 intermediates h / o
    tm = min(tm, max(8, vmem_budget_bytes // per_row_bytes))
    return max(8, (tm // 8) * 8)


def _make_call(n_pad, tm, dim_in, dim_h, dim_out_p, out_dtype,
               single_buffer_weights):
    def const_spec(shape):
        # Weights/biases never change across the grid: single-buffer them so
        # they don't eat 2x VMEM (matters at production post-MP widths).
        if single_buffer_weights:
            return pl.BlockSpec(shape, lambda i: (0, 0),
                                pipeline_mode=pl.Buffered(1))
        return pl.BlockSpec(shape, lambda i: (0, 0))

    return pl.pallas_call(
        _mlp_head_kernel,
        out_shape=jax.ShapeDtypeStruct((n_pad, dim_out_p), out_dtype),
        grid_spec=pl.GridSpec(
            grid=(n_pad // tm,),
            in_specs=[
                pl.BlockSpec((tm, dim_in), lambda i: (i, 0)),
                const_spec((dim_in, dim_h)),
                const_spec((1, dim_h)),
                const_spec((dim_h, dim_out_p)),
                const_spec((1, dim_out_p)),
            ],
            out_specs=pl.BlockSpec((tm, dim_out_p), lambda i: (i, 0)),
        ),
        compiler_params=pltpu.CompilerParams(
            dimension_semantics=("parallel",),
            vmem_limit_bytes=32 * 1024 * 1024,
        ),
    )


def gnn_inductive_node_head(x, y_true, w1, b1, w2, b2, *, tm_max=1024,
                            min_steps=4):
    """pred = MLP(x); returns (pred, true) like GNNInductiveNodeHead.forward."""
    n, dim_in = x.shape
    dim_h = w1.shape[1]
    dim_out = w2.shape[1]

    # Lane-dense output: zero-pad dim_out up to a multiple of 128 lanes so the
    # second matmul / stores are unmasked and full-width; padding is sliced off
    # below, so returned predictions are unchanged.
    dim_out_p = max(128, ((dim_out + 127) // 128) * 128)
    w2_p = jnp.zeros((dim_h, dim_out_p), w2.dtype).at[:, :dim_out].set(w2)
    b2_p = jnp.zeros((1, dim_out_p), b2.dtype).at[0, :dim_out].set(
        b2.reshape(-1))
    b1_2d = b1.reshape(1, dim_h)

    tm = _choose_tm(n, dim_in, dim_h, dim_out_p, jnp.dtype(x.dtype).itemsize,
                    tm_max=tm_max, min_steps=min_steps)

    # Pad node count to a multiple of the row tile (padded rows are sliced off;
    # downstream never sees them).
    n_pad = pl.cdiv(n, tm) * tm
    x_in = x if n_pad == n else jnp.zeros((n_pad, dim_in), x.dtype).at[:n].set(x)

    args = (x_in, w1, b1_2d, w2_p, b2_p)
    try:
        pred_p = _make_call(n_pad, tm, dim_in, dim_h, dim_out_p, x.dtype,
                            single_buffer_weights=True)(*args)
    except Exception:
        # pipeline_mode=pl.Buffered(1) not supported on this jax build; the
        # default double-buffered weight tiles are numerically identical.
        pred_p = _make_call(n_pad, tm, dim_in, dim_h, dim_out_p, x.dtype,
                            single_buffer_weights=False)(*args)

    pred = pred_p[:n, :dim_out]

    # _apply_index with cfg.virtual_node = False: identity on (pred, true).
    # TODO(synk): virtual_node=True path (per-graph drop-last-node gather) is a
    # data-dependent gather; left out of the kernel (cfg.virtual_node=False).
    return pred, y_true


if __name__ == "__main__":
    # Small shapes: N=128 nodes, dim_in=32, dim_inner=32 (== dim_in), dim_out=8
    N, DIM_IN, DIM_H, DIM_OUT = 128, 32, 32, 8

    key = jax.random.PRNGKey(0)
    kx, ky, k1, k2, k3, k4 = jax.random.split(key, 6)

    x = jax.random.normal(kx, (N, DIM_IN), dtype=jnp.float32)
    y_true = jax.random.randint(ky, (N,), 0, DIM_OUT, dtype=jnp.int32)

    # Deterministic parameter init (Glorot-ish scaling), synthetic weights.
    w1 = jax.random.normal(k1, (DIM_IN, DIM_H), dtype=jnp.float32) / jnp.sqrt(DIM_IN)
    b1 = jax.random.normal(k2, (DIM_H,), dtype=jnp.float32) * 0.01
    w2 = jax.random.normal(k3, (DIM_H, DIM_OUT), dtype=jnp.float32) / jnp.sqrt(DIM_H)
    b2 = jax.random.normal(k4, (DIM_OUT,), dtype=jnp.float32) * 0.01

    pred, true = gnn_inductive_node_head(x, y_true, w1, b1, w2, b2)
    pred = jax.block_until_ready(pred)
    true = jax.block_until_ready(true)

    # Reference check in plain JAX.
    ref = jnp.maximum(x @ w1 + b1, 0.0) @ w2 + b2
    assert pred.shape == (N, DIM_OUT) and true.shape == (N,)
    assert jnp.allclose(pred, ref, atol=1e-5, rtol=1e-5)

    print("KERNEL_OK")
</pallas_src>

<mosaic_0001>
module attributes {stable_mosaic.version = 11 : i64} {
  func.func @_mlp_head_kernel(%arg0: i32, %arg1: memref<32x32xf32, #tpu.memory_space<vmem>>, %arg2: memref<32x32xf32, #tpu.memory_space<vmem>>, %arg3: memref<1x32xf32, #tpu.memory_space<vmem>>, %arg4: memref<32x128xf32, #tpu.memory_space<vmem>>, %arg5: memref<1x128xf32, #tpu.memory_space<vmem>>, %arg6: memref<32x128xf32, #tpu.memory_space<vmem>>) attributes {dimension_semantics = [#tpu.dimension_semantics<parallel>], iteration_bounds = array<i64: 4>, scalar_prefetch = 0 : i64, scratch_operands = 0 : i64, tpu.core_type = #tpu.core_type<tc>, window_params = [{transform_indices = @transform_0, window_bounds = array<i64: 32, 32>}, {pipeline_mode = #tpu.pipeline_mode<synchronous>, transform_indices = @transform_1, window_bounds = array<i64: 32, 32>}, {pipeline_mode = #tpu.pipeline_mode<synchronous>, transform_indices = @transform_2, window_bounds = array<i64: 1, 32>}, {pipeline_mode = #tpu.pipeline_mode<synchronous>, transform_indices = @transform_3, window_bounds = array<i64: 32, 128>}, {pipeline_mode = #tpu.pipeline_mode<synchronous>, transform_indices = @transform_4, window_bounds = array<i64: 1, 128>}, {transform_indices = @transform_5, window_bounds = array<i64: 32, 128>}]} {
    %c0 = arith.constant 0 : index
    %c0_0 = arith.constant 0 : index
    %0 = vector.load %arg1[%c0, %c0_0] : memref<32x32xf32, #tpu.memory_space<vmem>>, vector<32x32xf32>
    %c0_1 = arith.constant 0 : index
    %c0_2 = arith.constant 0 : index
    %1 = vector.load %arg2[%c0_1, %c0_2] : memref<32x32xf32, #tpu.memory_space<vmem>>, vector<32x32xf32>
    %cst = arith.constant dense<0.000000e+00> : vector<32x32xf32>
    %2 = tpu.matmul %0, %1, %cst {dimension_numbers = #tpu.dot_dimension_numbers<[1], [0], [0], [1], [0, 0, 1, 1], [], []>} : vector<32x32xf32>, vector<32x32xf32>, vector<32x32xf32> -> vector<32x32xf32>
    %c0_3 = arith.constant 0 : index
    %c0_4 = arith.constant 0 : index
    %3 = vector.load %arg3[%c0_3, %c0_4] : memref<1x32xf32, #tpu.memory_space<vmem>>, vector<1x32xf32>
    %4 = vector.broadcast %3 : vector<1x32xf32> to vector<32x32xf32>
    %5 = arith.addf %2, %4 : vector<32x32xf32>
    %cst_5 = arith.constant 0.000000e+00 : f32
    %6 = vector.broadcast %cst_5 : f32 to vector<32x32xf32>
    %7 = arith.maximumf %5, %6 : vector<32x32xf32>
    %c0_6 = arith.constant 0 : index
    %c0_7 = arith.constant 0 : index
    %8 = vector.load %arg4[%c0_6, %c0_7] : memref<32x128xf32, #tpu.memory_space<vmem>>, vector<32x128xf32>
    %cst_8 = arith.constant dense<0.000000e+00> : vector<32x128xf32>
    %9 = tpu.matmul %7, %8, %cst_8 {dimension_numbers = #tpu.dot_dimension_numbers<[1], [0], [0], [1], [0, 0, 1, 1], [], []>} : vector<32x32xf32>, vector<32x128xf32>, vector<32x128xf32> -> vector<32x128xf32>
    %c0_9 = arith.constant 0 : index
    %c0_10 = arith.constant 0 : index
    %10 = vector.load %arg5[%c0_9, %c0_10] : memref<1x128xf32, #tpu.memory_space<vmem>>, vector<1x128xf32>
    %11 = vector.broadcast %10 : vector<1x128xf32> to vector<32x128xf32>
    %12 = arith.addf %9, %11 : vector<32x128xf32>
    %c0_11 = arith.constant 0 : index
    %c0_12 = arith.constant 0 : index
    %13 = vector.load %arg6[%c0_11, %c0_12] : memref<32x128xf32, #tpu.memory_space<vmem>>, vector<32x128xf32>
    tpu.vector_store %arg6[%c0_11, %c0_12], %12 {strides = array<i32>} : memref<32x128xf32, #tpu.memory_space<vmem>>, vector<32x128xf32>,
    return
  }
  func.func @transform_0(%arg0: i32) -> (i32, i32) {
    %c0_i32 = arith.constant 0 : i32
    %c0_i32_0 = arith.constant 0 : i32
    return %arg0, %c0_i32 : i32, i32
  }
  func.func @transform_1(%arg0: i32) -> (i32, i32) {
    %c0_i32 = arith.constant 0 : i32
    %c0_i32_0 = arith.constant 0 : i32
    %c0_i32_1 = arith.constant 0 : i32
    return %c0_i32, %c0_i32_0 : i32, i32
  }
  func.func @transform_2(%arg0: i32) -> (i32, i32) {
    %c0_i32 = arith.constant 0 : i32
    %c0_i32_0 = arith.constant 0 : i32
    %c0_i32_1 = arith.constant 0 : i32
    return %c0_i32, %c0_i32_0 : i32, i32
  }
  func.func @transform_3(%arg0: i32) -> (i32, i32) {
    %c0_i32 = arith.constant 0 : i32
    %c0_i32_0 = arith.constant 0 : i32
    %c0_i32_1 = arith.constant 0 : i32
    return %c0_i32, %c0_i32_0 : i32, i32
  }
  func.func @transform_4(%arg0: i32) -> (i32, i32) {
    %c0_i32 = arith.constant 0 : i32
    %c0_i32_0 = arith.constant 0 : i32
    %c0_i32_1 = arith.constant 0 : i32
    return %c0_i32, %c0_i32_0 : i32, i32
  }
  func.func @transform_5(%arg0: i32) -> (i32, i32) {
    %c0_i32 = arith.constant 0 : i32
    %c0_i32_0 = arith.constant 0 : i32
    return %arg0, %c0_i32 : i32, i32
  }
}

module attributes {stable_mosaic.version = 11 : i64} {
  func.func @_mlp_head_kernel(%arg0: i32, %arg1: memref<32x32xf32, #tpu.memory_space<vmem>>, %arg2: memref<32x32xf32, #tpu.memory_space<vmem>>, %arg3: memref<1x32xf32, #tpu.memory_space<vmem>>, %arg4: memref<32x128xf32, #tpu.memory_space<vmem>>, %arg5: memref<1x128xf32, #tpu.memory_space<vmem>>, %arg6: memref<32x128xf32, #tpu.memory_space<vmem>>) attributes {dimension_semantics = [#tpu.dimension_semantics<parallel>], iteration_bounds = array<i64: 4>, scalar_prefetch = 0 : i64, scratch_operands = 0 : i64, tpu.core_type = #tpu.core_type<tc>, window_params = [{transform_indices = @transform_0, window_bounds = array<i64: 32, 32>}, {pipeline_mode = #tpu.pipeline_mode<synchronous>, transform_indices = @transform_1, window_bounds = array<i64: 32, 32>}, {pipeline_mode = #tpu.pipeline_mode<synchronous>, transform_indices = @transform_2, window_bounds = array<i64: 1, 32>}, {pipeline_mode = #tpu.pipeline_mode<synchronous>, transform_indices = @transform_3, window_bounds = array<i64: 32, 128>}, {pipeline_mode = #tpu.pipeline_mode<synchronous>, transform_indices = @transform_4, window_bounds = array<i64: 1, 128>}, {transform_indices = @transform_5, window_bounds = array<i64: 32, 128>}]} {
    %c0 = arith.constant 0 : index
    %c0_0 = arith.constant 0 : index
    %0 = vector.load %arg1[%c0, %c0_0] : memref<32x32xf32, #tpu.memory_space<vmem>>, vector<32x32xf32>
    %c0_1 = arith.constant 0 : index
    %c0_2 = arith.constant 0 : index
    %1 = vector.load %arg2[%c0_1, %c0_2] : memref<32x32xf32, #tpu.memory_space<vmem>>, vector<32x32xf32>
    %cst = arith.constant dense<0.000000e+00> : vector<32x32xf32>
    %2 = tpu.matmul %0, %1, %cst {dimension_numbers = #tpu.dot_dimension_numbers<[1], [0], [0], [1], [0, 0, 1, 1], [], []>} : vector<32x32xf32>, vector<32x32xf32>, vector<32x32xf32> -> vector<32x32xf32>
    %c0_3 = arith.constant 0 : index
    %c0_4 = arith.constant 0 : index
    %3 = vector.load %arg3[%c0_3, %c0_4] : memref<1x32xf32, #tpu.memory_space<vmem>>, vector<1x32xf32>
    %4 = vector.broadcast %3 : vector<1x32xf32> to vector<32x32xf32>
    %5 = arith.addf %2, %4 : vector<32x32xf32>
    %cst_5 = arith.constant 0.000000e+00 : f32
    %6 = vector.broadcast %cst_5 : f32 to vector<32x32xf32>
    %7 = arith.maximumf %5, %6 : vector<32x32xf32>
    %c0_6 = arith.constant 0 : index
    %c0_7 = arith.constant 0 : index
    %8 = vector.load %arg4[%c0_6, %c0_7] : memref<32x128xf32, #tpu.memory_space<vmem>>, vector<32x128xf32>
    %cst_8 = arith.constant dense<0.000000e+00> : vector<32x128xf32>
    %9 = tpu.matmul %7, %8, %cst_8 {dimension_numbers = #tpu.dot_dimension_numbers<[1], [0], [0], [1], [0, 0, 1, 1], [], []>} : vector<32x32xf32>, vector<32x128xf32>, vector<32x128xf32> -> vector<32x128xf32>
    %c0_9 = arith.constant 0 : index
    %c0_10 = arith.constant 0 : index
    %10 = vector.load %arg5[%c0_9, %c0_10] : memref<1x128xf32, #tpu.memory_space<vmem>>, vector<1x128xf32>
    %11 = vector.broadcast %10 : vector<1x128xf32> to vector<32x128xf32>
    %12 = arith.addf %9, %11 : vector<32x128xf32>
    %c0_11 = arith.constant 0 : index
    %c0_12 = arith.constant 0 : index
    %13 = vector.load %arg6[%c0_11, %c0_12] : memref<32x128xf32, #tpu.memory_space<vmem>>, vector<32x128xf32>
    tpu.vector_store %arg6[%c0_11, %c0_12], %12 {strides = array<i32>} : memref<32x128xf32, #tpu.memory_space<vmem>>, vector<32x128xf32>,
    return
  }
  func.func @transform_0(%arg0: i32) -> (i32, i32) {
    %c0_i32 = arith.constant 0 : i32
    %c0_i32_0 = arith.constant 0 : i32
    return %arg0, %c0_i32 : i32, i32
  }
  func.func @transform_1(%arg0: i32) -> (i32, i32) {
    %c0_i32 = arith.constant 0 : i32
    %c0_i32_0 = arith.constant 0 : i32
    %c0_i32_1 = arith.constant 0 : i32
    return %c0_i32, %c0_i32_0 : i32, i32
  }
  func.func @transform_2(%arg0: i32) -> (i32, i32) {
    %c0_i32 = arith.constant 0 : i32
    %c0_i32_0 = arith.constant 0 : i32
    %c0_i32_1 = arith.constant 0 : i32
    return %c0_i32, %c0_i32_0 : i32, i32
  }
  func.func @transform_3(%arg0: i32) -> (i32, i32) {
    %c0_i32 = arith.constant 0 : i32
    %c0_i32_0 = arith.constant 0 : i32
    %c0_i32_1 = arith.constant 0 : i32
    return %c0_i32, %c0_i32_0 : i32, i32
  }
  func.func @transform_4(%arg0: i32) -> (i32, i32) {
    %c0_i32 = arith.constant 0 : i32
    %c0_i32_0 = arith.constant 0 : i32
    %c0_i32_1 = arith.constant 0 : i32
    return %c0_i32, %c0_i32_0 : i32, i32
  }
  func.func @transform_5(%arg0: i32) -> (i32, i32) {
    %c0_i32 = arith.constant 0 : i32
    %c0_i32_0 = arith.constant 0 : i32
    return %arg0, %c0_i32 : i32, i32
  }
}

</mosaic_0001>

<llo_original>
// kernel: tpu_custom_call.1
$region0: #{tpu_custom_call.1}
  #allocation0 [shape = 'u32[]', space=smem, size = 0x4, offset = 0x4, fixed_abs, tag = 'smem constant byte address 0x4 - core index']
  #allocation1 [shape = 'u32[144,128]{1,0:T(1,128)}', space=vmem, size = 0x12000, scoped, tag = 'internal scratch']
  %s0 = inlined_call_operand.vmem [shape: f32[128,32], index: 0, kind: input, shape index: {}]
  %s1 = inlined_call_operand.vmem [shape: f32[32,32], index: 1, kind: input, shape index: {}]
  %s2 = inlined_call_operand.vmem [shape: f32[1,32], index: 2, kind: input, shape index: {}]
  %s3 = inlined_call_operand.vmem [shape: f32[32,128], index: 3, kind: input, shape index: {}]
  %s4 = inlined_call_operand.vmem [shape: f32[1,128], index: 4, kind: input, shape index: {}]
  %s5 = inlined_call_operand.hbm [shape: f32[128,128], index: 5, kind: output, shape index: {}]
  %s6 = sld [smem:[#allocation0]]
  $region53: #{tpu_custom_call.1} parent=0
    _
  %s8 = ssub.s32 1, %s6
  %s9 = scalar_select 0, %s8, %s6
  $region1: #{tpu_custom_call.1} parent=0
    #allocation2 [shape = 'u8[32768]{0}', space=vmem, size = 0x8000, scoped, tag = 'output window, operand 0']
    #allocation3 [shape = 's32[2]{0}', space=sflag, size = 0x8, scoped, tag = 'scoped memory for tpu_custom_call.1']
    %10 = vsyncpa [#allocation3], 0
    %s11 = scalar_lea.sflag [#allocation3], 1
    %12 = vsyncpa %s11, 0
    loop: start=0, step=1, limit=6
    $region2: #{tpu_custom_call.1} parent=1 // loop_pre_header
      _
    $region3: #{tpu_custom_call.1} parent=1 // loop_header
      %s14 = sphi 0, %s18
      %p15 = scmp.ge.s32.totalorder %s14, 6
      %s24 = sphi 0, %s26
      %s27 = sphi 0, %s24
      %s28 = sphi 0, %s27
      %s44 = sphi 0, %s28
      %s48 = sphi 0, %s48
      %s50 = sphi 0, %s48
      %s51 = sphi 0, %s50
      %s65 = sphi 0, %s51
      %s69 = sphi 0, %s69
      %s71 = sphi 0, %s69
      %s72 = sphi 0, %s71
      %s86 = sphi 0, %s72
      %s90 = sphi 0, %s90
      %s92 = sphi 0, %s90
      %s93 = sphi 0, %s92
      %s107 = sphi 0, %s93
      %s111 = sphi 0, %s111
      %s113 = sphi 0, %s111
      %s114 = sphi 0, %s113
      %s128 = sphi 0, %s114
      %s134 = sphi 0, %s136
      %s137 = sphi 0, %s134
      %s138 = sphi 0, %s137
      %s154 = sphi 0, %s138
    $region4: #{tpu_custom_call.1} parent=1 // loop_header_branch
      %17 = sbr.rel (%p15) target = $region8
    $region5: #{tpu_custom_call.1} parent=1 // loop_body
      %s19 = ssub.s32 %s14, 1
      %s20 = ssub.s32 %s14, 2
      %s21 = sadd.s32 %s14, 1
      %s22 = ssub.s32 %s14, %s21
      %p23 = scmp.eq.s32.totalorder %s22, 0
      %s25 = sadd.s32 %s24, 1
      %s26 = scalar_select %p23, %s24, %s25
      %p29 = pneg %p23
      %p30 = scmp.eq.s32.totalorder %s14, 3
      %p31 = por %p29, %p30
      %p32 = scmp.ne.s32.totalorder %s24, %s27
      %p33 = scmp.eq.s32.totalorder %s14, 0
      %p34 = por %p32, %p33
      %p35 = scmp.ne.s32.totalorder %s24, %s27
      %p36 = scmp.eq.s32.totalorder %s19, 3
      %p37 = por %p35, %p36
      %p38 = scmp.ne.s32.totalorder %s27, %s28
      %p39 = scmp.eq.s32.totalorder %s19, 0
      %p40 = por %p38, %p39
      %p41 = scmp.ne.s32.totalorder %s27, %s28
      %p42 = scmp.eq.s32.totalorder %s20, 3
      %p43 = por %p41, %p42
      %p45 = scmp.ne.s32.totalorder %s28, %s44
      %p46 = scmp.eq.s32.totalorder %s20, 0
      %p47 = por %p45, %p46
      %s49 = sadd.s32 %s48, 1
      %p52 = scmp.eq.s32.totalorder %s14, 3
      %p53 = scmp.ne.s32.totalorder %s48, %s50
      %p54 = scmp.eq.s32.totalorder %s14, 0
      %p55 = por %p53, %p54
      %p56 = scmp.ne.s32.totalorder %s48, %s50
      %p57 = scmp.eq.s32.totalorder %s19, 3
      %p58 = por %p56, %p57
      %p59 = scmp.ne.s32.totalorder %s50, %s51
      %p60 = scmp.eq.s32.totalorder %s19, 0
      %p61 = por %p59, %p60
      %p62 = scmp.ne.s32.totalorder %s50, %s51
      %p63 = scmp.eq.s32.totalorder %s20, 3
      %p64 = por %p62, %p63
      %p66 = scmp.ne.s32.totalorder %s51, %s65
      %p67 = scmp.eq.s32.totalorder %s20, 0
      %p68 = por %p66, %p67
      %s70 = sadd.s32 %s69, 1
      %p73 = scmp.eq.s32.totalorder %s14, 3
      %p74 = scmp.ne.s32.totalorder %s69, %s71
      %p75 = scmp.eq.s32.totalorder %s14, 0
      %p76 = por %p74, %p75
      %p77 = scmp.ne.s32.totalorder %s69, %s71
      %p78 = scmp.eq.s32.totalorder %s19, 3
      %p79 = por %p77, %p78
      %p80 = scmp.ne.s32.totalorder %s71, %s72
      %p81 = scmp.eq.s32.totalorder %s19, 0
      %p82 = por %p80, %p81
      %p83 = scmp.ne.s32.totalorder %s71, %s72
      %p84 = scmp.eq.s32.totalorder %s20, 3
      %p85 = por %p83, %p84
      %p87 = scmp.ne.s32.totalorder %s72, %s86
      %p88 = scmp.eq.s32.totalorder %s20, 0
      %p89 = por %p87, %p88
      %s91 = sadd.s32 %s90, 1
      %p94 = scmp.eq.s32.totalorder %s14, 3
      %p95 = scmp.ne.s32.totalorder %s90, %s92
      %p96 = scmp.eq.s32.totalorder %s14, 0
      %p97 = por %p95, %p96
      %p98 = scmp.ne.s32.totalorder %s90, %s92
      %p99 = scmp.eq.s32.totalorder %s19, 3
      %p100 = por %p98, %p99
      %p101 = scmp.ne.s32.totalorder %s92, %s93
      %p102 = scmp.eq.s32.totalorder %s19, 0
      %p103 = por %p101, %p102
      %p104 = scmp.ne.s32.totalorder %s92, %s93
      %p105 = scmp.eq.s32.totalorder %s20, 3
      %p106 = por %p104, %p105
      %p108 = scmp.ne.s32.totalorder %s93, %s107
      %p109 = scmp.eq.s32.totalorder %s20, 0
      %p110 = por %p108, %p109
      %s112 = sadd.s32 %s111, 1
      %p115 = scmp.eq.s32.totalorder %s14, 3
      %p116 = scmp.ne.s32.totalorder %s111, %s113
      %p117 = scmp.eq.s32.totalorder %s14, 0
      %p118 = por %p116, %p117
      %p119 = scmp.ne.s32.totalorder %s111, %s113
      %p120 = scmp.eq.s32.totalorder %s19, 3
      %p121 = por %p119, %p120
      %p122 = scmp.ne.s32.totalorder %s113, %s114
      %p123 = scmp.eq.s32.totalorder %s19, 0
      %p124 = por %p122, %p123
      %p125 = scmp.ne.s32.totalorder %s113, %s114
      %p126 = scmp.eq.s32.totalorder %s20, 3
      %p127 = por %p125, %p126
      %p129 = scmp.ne.s32.totalorder %s114, %s128
      %p130 = scmp.eq.s32.totalorder %s20, 0
      %p131 = por %p129, %p130
      %s132 = ssub.s32 %s14, %s21
      %p133 = scmp.eq.s32.totalorder %s132, 0
      %s135 = sadd.s32 %s134, 1
      %s136 = scalar_select %p133, %s134, %s135
      %p139 = pneg %p133
      %p140 = scmp.eq.s32.totalorder %s14, 3
      %p141 = por %p139, %p140
      %p142 = scmp.ne.s32.totalorder %s134, %s137
      %p143 = scmp.eq.s32.totalorder %s14, 0
      %p144 = por %p142, %p143
      %p145 = scmp.ne.s32.totalorder %s134, %s137
      %p146 = scmp.eq.s32.totalorder %s19, 3
      %p147 = por %p145, %p146
      %p148 = scmp.ne.s32.totalorder %s137, %s138
      %p149 = scmp.eq.s32.totalorder %s19, 0
      %p150 = por %p148, %p149
      %p151 = scmp.ne.s32.totalorder %s137, %s138
      %p152 = scmp.eq.s32.totalorder %s20, 3
      %p153 = por %p151, %p152
      %p155 = scmp.ne.s32.totalorder %s138, %s154
      %p156 = scmp.eq.s32.totalorder %s20, 0
      %p157 = por %p155, %p156
      %p158 = scmp.le.s32.totalorder 1, %s14
      %p159 = scmp.lt.s32.totalorder %s14, 5
      %p160 = pnand %p158, %p159
      %p161 = pneg %p160
      // Predicated region
      $region9: #{tpu_custom_call.1} parent=5 // pred_check
        _
      $region10: #{tpu_custom_call.1} parent=5 // pred_check_branch
        %163 = sbr.rel (%p160) target = $region12
      $region11: #{tpu_custom_call.1} parent=5 // pred_region
        %s164 = ssub.s32 %s14, 1
        // Predicated region
        $region13: #{tpu_custom_call.1} parent=11 // pred_check
          %p165 = pneg %p61
        $region14: #{tpu_custom_call.1} parent=11 // pred_check_branch
          %167 = sbr.rel (%p165) target = $region16
        $region15: #{tpu_custom_call.1} parent=11 // pred_region
          _
        $region16: #{tpu_custom_call.1} parent=11 // pred_fallthru
          _
        // Predicated region
        $region17: #{tpu_custom_call.1} parent=11 // pred_check
          %p168 = pneg %p82
        $region18: #{tpu_custom_call.1} parent=11 // pred_check_branch
          %170 = sbr.rel (%p168) target = $region20
        $region19: #{tpu_custom_call.1} parent=11 // pred_region
          _
        $region20: #{tpu_custom_call.1} parent=11 // pred_fallthru
          _
        // Predicated region
        $region21: #{tpu_custom_call.1} parent=11 // pred_check
          %p171 = pneg %p103
        $region22: #{tpu_custom_call.1} parent=11 // pred_check_branch
          %173 = sbr.rel (%p171) target = $region24
        $region23: #{tpu_custom_call.1} parent=11 // pred_region
          _
        $region24: #{tpu_custom_call.1} parent=11 // pred_fallthru
          _
        // Predicated region
        $region25: #{tpu_custom_call.1} parent=11 // pred_check
          %p174 = pneg %p124
        $region26: #{tpu_custom_call.1} parent=11 // pred_check_branch
          %176 = sbr.rel (%p174) target = $region28
        $region27: #{tpu_custom_call.1} parent=11 // pred_region
          _
        $region28: #{tpu_custom_call.1} parent=11 // pred_fallthru
          _
      $region12: #{tpu_custom_call.1} parent=5 // pred_fallthru
        _
      %p177 = scmp.lt.s32.totalorder %s14, 4
      // Predicated region
      $region29: #{tpu_custom_call.1} parent=5 // pred_check
        %p178 = pneg %p177
      $region30: #{tpu_custom_call.1} parent=5 // pred_check_branch
        %180 = sbr.rel (%p178) target = $region32
      $region31: #{tpu_custom_call.1} parent=5 // pred_region
        // Predicated region
        $region33: #{tpu_custom_call.1} parent=31 // pred_check
          %p181 = pneg %p34
        $region34: #{tpu_custom_call.1} parent=31 // pred_check_branch
          %183 = sbr.rel (%p181) target = $region36
        $region35: #{tpu_custom_call.1} parent=31 // pred_region
          %s184 = smul.u32 4, %s14
          %p185 = scmp.lt.s32.totalorder %s184, 15
          %s186 = scalar_select %p185, %s184, 15
          %s187 = smul.addr %s186, 8
          %s188 = scalar_lea.vmem %s0, %s187
          %s189 = smul.u32 4, %s14
        $region36: #{tpu_custom_call.1} parent=31 // pred_fallthru
          _
      $region32: #{tpu_custom_call.1} parent=5 // pred_fallthru
        _
      %p190 = scmp.le.s32.totalorder 1, %s14
      %p191 = scmp.lt.s32.totalorder %s14, 5
      %p192 = pnand %p190, %p191
      %p193 = pneg %p192
      // Predicated region
      $region37: #{tpu_custom_call.1} parent=5 // pred_check
        _
      $region38: #{tpu_custom_call.1} parent=5 // pred_check_branch
        %195 = sbr.rel (%p192) target = $region40
      $region39: #{tpu_custom_call.1} parent=5 // pred_region
        %s196 = ssub.s32 %s14, 1
        %s197 = smul.u32 4, %s19
        %p198 = scmp.lt.s32.totalorder %s197, 15
        %s199 = scalar_select %p198, %s197, 15
        %s200 = smul.addr %s199, 8
        %s201 = scalar_lea.vmem %s0, %s200
        %p202 = pneg %p40
        %p203 = pneg %p37
        %p204 = pneg %p61
        %p205 = pneg %p58
        %p206 = pneg %p82
        %p207 = pneg %p79
        %p208 = pneg %p103
        %p209 = pneg %p100
        %p210 = pneg %p124
        %p211 = pneg %p121
        %p212 = pneg %p150
        %p213 = pneg %p147
        %s214 = sand.u32 %s137, 1
        %s215 = scalar_lea.sflag [#allocation3], %s214
        %s216 = sand.u32 %s137, 1
        %s217 = smul.addr %s216, 32
        %s218 = scalar_lea.vmem [#allocation2], %s217
        %s219 = smul.u32 4, %s19
        %p220 = scmp.lt.s32.totalorder %s219, 15
        %s221 = scalar_select %p220, %s219, 15
        %s222 = smul.addr %s221, 8
        %s223 = scalar_lea.vmem %s0, %s222
        %s224 = smul.u32 4, %s19
        %s225 = smul.u32 4, %s19
        %v226 = vld [vmem:[%s223] sm:$0xff]
        %v227 = vld [vmem:[%s223 + $0x8] sm:$0xff]
        %v228 = vld [vmem:[%s223 + $0x10] sm:$0xff]
        %v229 = vld [vmem:[%s223 + $0x18] sm:$0xff]
        %v230 = vld [vmem:[%s1] sm:$0xff]
        %v231 = vld [vmem:[%s1 + $0x8] sm:$0xff]
        %v232 = vld [vmem:[%s1 + $0x10] sm:$0xff]
        %v233 = vld [vmem:[%s1 + $0x18] sm:$0xff]
        %v234 = vld [vmem:[%s2] sm:$0x1]
        %v236 = vlaneseq
        %v237 = vshrl.u32 %v236, 7
        %v238 = vsub.s32 0, %v237
        %v239 = vrot.slane %v234, %v238
        %vm241 = vcmask 261120
        %v243 = vsel %vm241, %v226, 0
        %v246 = vsel %vm241, %v227, 0
        %v249 = vsel %vm241, %v228, 0
        %v252 = vsel %vm241, %v229, 0
        %254 = vmatprep.subr.mxu0 0.0
        %255 = vmatpush1.msra.mxu0 %v230
        %256 = vmatprep.subr.mxu0 0.0
        %257 = vmatpush1.msra.mxu0 %v231
        %258 = vmatprep.subr.mxu0 0.0
        %259 = vmatpush1.msra.mxu0 %v232
        %260 = vmatprep.subr.mxu0 0.0
        %261 = vmatpush1.msra.mxu0 %v233
        %262 = vmatprep.subr.mxu0 0.0
        %263 = vmatpush1.msra.mxu0 0.0
        %264 = vmatprep.subr.mxu0 0.0
        %265 = vmatpush1.msra.mxu0 0.0
        %266 = vmatprep.subr.mxu0 0.0
        %267 = vmatpush1.msra.mxu0 0.0
        %268 = vmatprep.subr.mxu0 0.0
        %269 = vmatpush1.msra.mxu0 0.0
        %270 = vmatprep.subr.mxu0 0.0
        %271 = vmatpush1.msra.mxu0 0.0
        %272 = vmatprep.subr.mxu0 0.0
        %273 = vmatpush1.msra.mxu0 0.0
        %274 = vmatprep.subr.mxu0 0.0
        %275 = vmatpush1.msra.mxu0 0.0
        %276 = vmatprep.subr.mxu0 0.0
        %277 = vmatpush1.msra.mxu0 0.0
        %278 = vmatprep.subr.mxu0 0.0
        %279 = vmatpush1.msra.mxu0 0.0
        %280 = vmatprep.subr.mxu0 0.0
        %281 = vmatpush1.msra.mxu0 0.0
        %282 = vmatprep.subr.mxu0 0.0
        %283 = vmatpush1.msra.mxu0 0.0
        %284 = vmatprep.subr.mxu0 0.0
        %285 = vmatpush1.msra.mxu0 0.0
        %286 = vmatprep.subr.mxu0 0.0
        %287 = vmatpush1.msra.mxu0 0.0
        %288 = vmatprep.subr.mxu0 0.0
        %289 = vmatpush1.msra.mxu0 0.0
        %290 = vmatprep.subr.mxu0 0.0
        %291 = vmatpush1.msra.mxu0 0.0
        %292 = vmatprep.subr.mxu0 0.0
        %293 = vmatpush1.msra.mxu0 0.0
        %294 = vmatprep.subr.mxu0 0.0
        %295 = vmatpush1.msra.mxu0 0.0
        %296 = vmatprep.subr.mxu0 0.0
        %297 = vmatpush1.msra.mxu0 0.0
        %298 = vmatprep.subr.mxu0 0.0
        %299 = vmatpush1.msra.mxu0 0.0
        %300 = vmatprep.subr.mxu0 0.0
        %301 = vmatpush1.msra.mxu0 0.0
        %302 = vmatprep.subr.mxu0 0.0
        %303 = vmatpush1.msra.mxu0 0.0
        %304 = vmatprep.subr.mxu0 0.0
        %305 = vmatpush1.msra.mxu0 0.0
        %306 = vmatprep.subr.mxu0 0.0
        %307 = vmatpush1.msra.mxu0 0.0
        %308 = vmatprep.subr.mxu0 0.0
        %309 = vmatpush1.msra.mxu0 0.0
        %310 = vmatprep.subr.mxu0 0.0
        %311 = vmatpush1.msra.mxu0 0.0
        %312 = vmatprep.subr.mxu0 0.0
        %313 = vmatpush1.msra.mxu0 0.0
        %314 = vmatprep.subr.mxu0 0.0
        %315 = vmatpush1.msra.mxu0 0.0
        %316 = vmatprep.subr.mxu0 0.0
        %317 = vmatpush1.msra.mxu0 0.0
        %318 = vmatprep.mubr.f32.mxu0 0.0
        %319 = vmatmul.mubr.f32.gmra.mrb[0].mxu0 %v243
        %v320 = vpop.f32.mrb[0].mxu0
        %v321 = vadd.f32 %v239, %v320
        %v322 = vpop.f32.mrb[0].mxu0
        %323 = vmatprep.mubr.f32.mxu0 0.0
        %324 = vmatmul.mubr.f32.gmra.mrb[0].mxu0 %v246
        %v325 = vpop.f32.mrb[0].mxu0
        %v326 = vadd.f32 %v239, %v325
        %v327 = vpop.f32.mrb[0].mxu0
        %328 = vmatprep.mubr.f32.mxu0 0.0
        %329 = vmatmul.mubr.f32.gmra.mrb[0].mxu0 %v249
        %v330 = vpop.f32.mrb[0].mxu0
        %v331 = vadd.f32 %v239, %v330
        %v332 = vpop.f32.mrb[0].mxu0
        %333 = vmatprep.mubr.f32.mxu0 0.0
        %334 = vmatmul.mubr.f32.gmra.mrb[0].mxu0 %v252
        %v335 = vpop.f32.mrb[0].mxu0
        %v336 = vadd.f32 %v239, %v335
        %v337 = vpop.f32.mrb[0].mxu0
        %338 = vdwg.mxu0
        %v339 = vmax.f32 %v321, 0.0
        %v340 = vmax.f32 %v326, 0.0
        %v341 = vmax.f32 %v331, 0.0
        %v342 = vmax.f32 %v336, 0.0
        %v343 = vld [vmem:[%s3] sm:$0xff]
        %v344 = vld [vmem:[%s3 + $0x8] sm:$0xff]
        %v345 = vld [vmem:[%s3 + $0x10] sm:$0xff]
        %v346 = vld [vmem:[%s3 + $0x18] sm:$0xff]
        %v347 = vld [vmem:[%s4] sm:$0x1]
        %v349 = vlaneseq
        %v350 = vshrl.u32 %v349, 7
        %v351 = vsub.s32 0, %v350
        %v352 = vrot.slane %v347, %v351
        %v355 = vsel %vm241, %v339, 0
        %v358 = vsel %vm241, %v340, 0
        %v361 = vsel %vm241, %v341, 0
        %v364 = vsel %vm241, %v342, 0
        %366 = vmatprep.subr.mxu0 0.0
        %367 = vmatpush1.msra.mxu0 %v343
        %368 = vmatprep.subr.mxu0 0.0
        %369 = vmatpush1.msra.mxu0 %v344
        %370 = vmatprep.subr.mxu0 0.0
        %371 = vmatpush1.msra.mxu0 %v345
        %372 = vmatprep.subr.mxu0 0.0
        %373 = vmatpush1.msra.mxu0 %v346
        %374 = vmatprep.subr.mxu0 0.0
        %375 = vmatpush1.msra.mxu0 0.0
        %376 = vmatprep.subr.mxu0 0.0
        %377 = vmatpush1.msra.mxu0 0.0
        %378 = vmatprep.subr.mxu0 0.0
        %379 = vmatpush1.msra.mxu0 0.0
        %380 = vmatprep.subr.mxu0 0.0
        %381 = vmatpush1.msra.mxu0 0.0
        %382 = vmatprep.subr.mxu0 0.0
        %383 = vmatpush1.msra.mxu0 0.0
        %384 = vmatprep.subr.mxu0 0.0
        %385 = vmatpush1.msra.mxu0 0.0
        %386 = vmatprep.subr.mxu0 0.0
        %387 = vmatpush1.msra.mxu0 0.0
        %388 = vmatprep.subr.mxu0 0.0
        %389 = vmatpush1.msra.mxu0 0.0
        %390 = vmatprep.subr.mxu0 0.0
        %391 = vmatpush1.msra.mxu0 0.0
        %392 = vmatprep.subr.mxu0 0.0
        %393 = vmatpush1.msra.mxu0 0.0
        %394 = vmatprep.subr.mxu0 0.0
        %395 = vmatpush1.msra.mxu0 0.0
        %396 = vmatprep.subr.mxu0 0.0
        %397 = vmatpush1.msra.mxu0 0.0
        %398 = vmatprep.subr.mxu0 0.0
        %399 = vmatpush1.msra.mxu0 0.0
        %400 = vmatprep.subr.mxu0 0.0
        %401 = vmatpush1.msra.mxu0 0.0
        %402 = vmatprep.subr.mxu0 0.0
        %403 = vmatpush1.msra.mxu0 0.0
        %404 = vmatprep.subr.mxu0 0.0
        %405 = vmatpush1.msra.mxu0 0.0
        %406 = vmatprep.subr.mxu0 0.0
        %407 = vmatpush1.msra.mxu0 0.0
        %408 = vmatprep.subr.mxu0 0.0
        %409 = vmatpush1.msra.mxu0 0.0
        %410 = vmatprep.subr.mxu0 0.0
        %411 = vmatpush1.msra.mxu0 0.0
        %412 = vmatprep.subr.mxu0 0.0
        %413 = vmatpush1.msra.mxu0 0.0
        %414 = vmatprep.subr.mxu0 0.0
        %415 = vmatpush1.msra.mxu0 0.0
        %416 = vmatprep.subr.mxu0 0.0
        %417 = vmatpush1.msra.mxu0 0.0
        %418 = vmatprep.subr.mxu0 0.0
        %419 = vmatpush1.msra.mxu0 0.0
        %420 = vmatprep.subr.mxu0 0.0
        %421 = vmatpush1.msra.mxu0 0.0
        %422 = vmatprep.subr.mxu0 0.0
        %423 = vmatpush1.msra.mxu0 0.0
        %424 = vmatprep.subr.mxu0 0.0
        %425 = vmatpush1.msra.mxu0 0.0
        %426 = vmatprep.subr.mxu0 0.0
        %427 = vmatpush1.msra.mxu0 0.0
        %428 = vmatprep.subr.mxu0 0.0
        %429 = vmatpush1.msra.mxu0 0.0
        %430 = vmatprep.mubr.f32.mxu0 0.0
        %431 = vmatmul.mubr.f32.gmra.mrb[0].mxu0 %v355
        %v432 = vpop.f32.mrb[0].mxu0
        %v433 = vadd.f32 %v352, %v432
        %v434 = vpop.f32.mrb[0].mxu0
        %435 = vmatprep.mubr.f32.mxu0 0.0
        %436 = vmatmul.mubr.f32.gmra.mrb[0].mxu0 %v358
        %v437 = vpop.f32.mrb[0].mxu0
        %v438 = vadd.f32 %v352, %v437
        %v439 = vpop.f32.mrb[0].mxu0
        %440 = vmatprep.mubr.f32.mxu0 0.0
        %441 = vmatmul.mubr.f32.gmra.mrb[0].mxu0 %v361
        %v442 = vpop.f32.mrb[0].mxu0
        %v443 = vadd.f32 %v352, %v442
        %v444 = vpop.f32.mrb[0].mxu0
        %445 = vmatprep.mubr.f32.mxu0 0.0
        %446 = vmatmul.mubr.f32.gmra.mrb[0].mxu0 %v364
        %v447 = vpop.f32.mrb[0].mxu0
        %v448 = vadd.f32 %v352, %v447
        %v449 = vpop.f32.mrb[0].mxu0
        %450 = vdwg.mxu0
        %451 = vst [vmem:[%s218] sm:$0xff] %v433
        %452 = vst [vmem:[%s218 + $0x8] sm:$0xff] %v438
        %453 = vst [vmem:[%s218 + $0x10] sm:$0xff] %v443
        %454 = vst [vmem:[%s218 + $0x18] sm:$0xff] %v448
        %s455 = sand.u32 %s137, 1
        %s456 = scalar_lea.sflag [#allocation3], %s455
        %s457 = sand.u32 %s137, 1
        %s458 = smul.addr %s457, 32
        %s459 = scalar_lea.vmem [#allocation2], %s458
        // Predicated region
        $region41: #{tpu_custom_call.1} parent=39 // pred_check
          %p460 = pneg %p147
        $region42: #{tpu_custom_call.1} parent=39 // pred_check_branch
          %462 = sbr.rel (%p460) target = $region44
        $region43: #{tpu_custom_call.1} parent=39 // pred_region
          %s463 = smul.u32 4, %s19
          %s465 = ssub.s32 512, 512
          %466 = vsyncadd %s456, %s465
          %s467 = smul.addr %s463, 128
          %s468 = scalar_lea.hbm %s5, %s467
          %s469 = sshll.u32 %s459, 4
          %s470 = int_to_ptr.vmem [resolvable:$true] %s469
          %475 = dma.vmem_to_hbm [thread:$0]  %s470, 512, %s468, %s456, 128, 128, 8
        $region44: #{tpu_custom_call.1} parent=39 // pred_fallthru
          _
      $region40: #{tpu_custom_call.1} parent=5 // pred_fallthru
        _
      %p476 = scmp.le.s32.totalorder 2, %s14
      // Predicated region
      $region45: #{tpu_custom_call.1} parent=5 // pred_check
        %p477 = pneg %p476
      $region46: #{tpu_custom_call.1} parent=5 // pred_check_branch
        %479 = sbr.rel (%p477) target = $region48
      $region47: #{tpu_custom_call.1} parent=5 // pred_region
        %s480 = ssub.s32 %s14, 2
        // Predicated region
        $region49: #{tpu_custom_call.1} parent=47 // pred_check
          %p481 = pneg %p153
        $region50: #{tpu_custom_call.1} parent=47 // pred_check_branch
          %483 = sbr.rel (%p481) target = $region52
        $region51: #{tpu_custom_call.1} parent=47 // pred_region
          %s484 = sand.u32 %s138, 1
          %s485 = scalar_lea.sflag [#allocation3], %s484
          %s486 = sand.u32 %s138, 1
          %s487 = smul.addr %s486, 32
          %s488 = scalar_lea.vmem [#allocation2], %s487
          %489 = dma.done %s485, 512
        $region52: #{tpu_custom_call.1} parent=47 // pred_fallthru
          _
      $region48: #{tpu_custom_call.1} parent=5 // pred_fallthru
        _
    $region6: #{tpu_custom_call.1} parent=1 // loop_footer
      %s18 = sadd.s32 1, %s14
    $region7: #{tpu_custom_call.1} parent=1 // loop_footer_branch
      %13 = sbr.rel target = $region3
    $region8: #{tpu_custom_call.1} parent=1 // loop_exit
      _
    %490 = vsyncpa [#allocation3], 1
    %s491 = scalar_lea.sflag [#allocation3], 1
    %492 = vsyncpa %s491, 1

// kernel: tpu_custom_call.1
$region0: #{tpu_custom_call.1}
  #allocation0 [shape = 'u32[]', space=smem, size = 0x4, offset = 0x4, fixed_abs, tag = 'smem constant byte address 0x4 - core index']
  #allocation1 [shape = 'u32[144,128]{1,0:T(1,128)}', space=vmem, size = 0x12000, scoped, tag = 'internal scratch']
  %s0 = inlined_call_operand.vmem [shape: f32[128,32], index: 0, kind: input, shape index: {}]
  %s1 = inlined_call_operand.vmem [shape: f32[32,32], index: 1, kind: input, shape index: {}]
  %s2 = inlined_call_operand.vmem [shape: f32[1,32], index: 2, kind: input, shape index: {}]
  %s3 = inlined_call_operand.vmem [shape: f32[32,128], index: 3, kind: input, shape index: {}]
  %s4 = inlined_call_operand.vmem [shape: f32[1,128], index: 4, kind: input, shape index: {}]
  %s5 = inlined_call_operand.hbm [shape: f32[128,128], index: 5, kind: output, shape index: {}]
  %s6 = sld [smem:[#allocation0]]
  $region53: #{tpu_custom_call.1} parent=0
    _
  %s8 = ssub.s32 1, %s6
  %s9 = scalar_select 0, %s8, %s6
  $region1: #{tpu_custom_call.1} parent=0
    #allocation2 [shape = 'u8[32768]{0}', space=vmem, size = 0x8000, scoped, tag = 'output window, operand 0']
    #allocation3 [shape = 's32[2]{0}', space=sflag, size = 0x8, scoped, tag = 'scoped memory for tpu_custom_call.1']
    %10 = vsyncpa [#allocation3], 0
    %s11 = scalar_lea.sflag [#allocation3], 1
    %12 = vsyncpa %s11, 0
    loop: start=0, step=1, limit=6
    $region2: #{tpu_custom_call.1} parent=1 // loop_pre_header
      _
    $region3: #{tpu_custom_call.1} parent=1 // loop_header
      %s14 = sphi 0, %s18
      %p15 = scmp.ge.s32.totalorder %s14, 6
      %s24 = sphi 0, %s26
      %s27 = sphi 0, %s24
      %s28 = sphi 0, %s27
      %s44 = sphi 0, %s28
      %s48 = sphi 0, %s48
      %s50 = sphi 0, %s48
      %s51 = sphi 0, %s50
      %s65 = sphi 0, %s51
      %s69 = sphi 0, %s69
      %s71 = sphi 0, %s69
      %s72 = sphi 0, %s71
      %s86 = sphi 0, %s72
      %s90 = sphi 0, %s90
      %s92 = sphi 0, %s90
      %s93 = sphi 0, %s92
      %s107 = sphi 0, %s93
      %s111 = sphi 0, %s111
      %s113 = sphi 0, %s111
      %s114 = sphi 0, %s113
      %s128 = sphi 0, %s114
      %s134 = sphi 0, %s136
      %s137 = sphi 0, %s134
      %s138 = sphi 0, %s137
      %s154 = sphi 0, %s138
    $region4: #{tpu_custom_call.1} parent=1 // loop_header_branch
      %17 = sbr.rel (%p15) target = $region8
    $region5: #{tpu_custom_call.1} parent=1 // loop_body
      %s19 = ssub.s32 %s14, 1
      %s20 = ssub.s32 %s14, 2
      %s21 = sadd.s32 %s14, 1
      %s22 = ssub.s32 %s14, %s21
      %p23 = scmp.eq.s32.totalorder %s22, 0
      %s25 = sadd.s32 %s24, 1
      %s26 = scalar_select %p23, %s24, %s25
      %p29 = pneg %p23
      %p30 = scmp.eq.s32.totalorder %s14, 3
      %p31 = por %p29, %p30
      %p32 = scmp.ne.s32.totalorder %s24, %s27
      %p33 = scmp.eq.s32.totalorder %s14, 0
      %p34 = por %p32, %p33
      %p35 = scmp.ne.s32.totalorder %s24, %s27
      %p36 = scmp.eq.s32.totalorder %s19, 3
      %p37 = por %p35, %p36
      %p38 = scmp.ne.s32.totalorder %s27, %s28
      %p39 = scmp.eq.s32.totalorder %s19, 0
      %p40 = por %p38, %p39
      %p41 = scmp.ne.s32.totalorder %s27, %s28
      %p42 = scmp.eq.s32.totalorder %s20, 3
      %p43 = por %p41, %p42
      %p45 = scmp.ne.s32.totalorder %s28, %s44
      %p46 = scmp.eq.s32.totalorder %s20, 0
      %p47 = por %p45, %p46
      %s49 = sadd.s32 %s48, 1
      %p52 = scmp.eq.s32.totalorder %s14, 3
      %p53 = scmp.ne.s32.totalorder %s48, %s50
      %p54 = scmp.eq.s32.totalorder %s14, 0
      %p55 = por %p53, %p54
      %p56 = scmp.ne.s32.totalorder %s48, %s50
      %p57 = scmp.eq.s32.totalorder %s19, 3
      %p58 = por %p56, %p57
      %p59 = scmp.ne.s32.totalorder %s50, %s51
      %p60 = scmp.eq.s32.totalorder %s19, 0
      %p61 = por %p59, %p60
      %p62 = scmp.ne.s32.totalorder %s50, %s51
      %p63 = scmp.eq.s32.totalorder %s20, 3
      %p64 = por %p62, %p63
      %p66 = scmp.ne.s32.totalorder %s51, %s65
      %p67 = scmp.eq.s32.totalorder %s20, 0
      %p68 = por %p66, %p67
      %s70 = sadd.s32 %s69, 1
      %p73 = scmp.eq.s32.totalorder %s14, 3
      %p74 = scmp.ne.s32.totalorder %s69, %s71
      %p75 = scmp.eq.s32.totalorder %s14, 0
      %p76 = por %p74, %p75
      %p77 = scmp.ne.s32.totalorder %s69, %s71
      %p78 = scmp.eq.s32.totalorder %s19, 3
      %p79 = por %p77, %p78
      %p80 = scmp.ne.s32.totalorder %s71, %s72
      %p81 = scmp.eq.s32.totalorder %s19, 0
      %p82 = por %p80, %p81
      %p83 = scmp.ne.s32.totalorder %s71, %s72
      %p84 = scmp.eq.s32.totalorder %s20, 3
      %p85 = por %p83, %p84
      %p87 = scmp.ne.s32.totalorder %s72, %s86
      %p88 = scmp.eq.s32.totalorder %s20, 0
      %p89 = por %p87, %p88
      %s91 = sadd.s32 %s90, 1
      %p94 = scmp.eq.s32.totalorder %s14, 3
      %p95 = scmp.ne.s32.totalorder %s90, %s92
      %p96 = scmp.eq.s32.totalorder %s14, 0
      %p97 = por %p95, %p96
      %p98 = scmp.ne.s32.totalorder %s90, %s92
      %p99 = scmp.eq.s32.totalorder %s19, 3
      %p100 = por %p98, %p99
      %p101 = scmp.ne.s32.totalorder %s92, %s93
      %p102 = scmp.eq.s32.totalorder %s19, 0
      %p103 = por %p101, %p102
      %p104 = scmp.ne.s32.totalorder %s92, %s93
      %p105 = scmp.eq.s32.totalorder %s20, 3
      %p106 = por %p104, %p105
      %p108 = scmp.ne.s32.totalorder %s93, %s107
      %p109 = scmp.eq.s32.totalorder %s20, 0
      %p110 = por %p108, %p109
      %s112 = sadd.s32 %s111, 1
      %p115 = scmp.eq.s32.totalorder %s14, 3
      %p116 = scmp.ne.s32.totalorder %s111, %s113
      %p117 = scmp.eq.s32.totalorder %s14, 0
      %p118 = por %p116, %p117
      %p119 = scmp.ne.s32.totalorder %s111, %s113
      %p120 = scmp.eq.s32.totalorder %s19, 3
      %p121 = por %p119, %p120
      %p122 = scmp.ne.s32.totalorder %s113, %s114
      %p123 = scmp.eq.s32.totalorder %s19, 0
      %p124 = por %p122, %p123
      %p125 = scmp.ne.s32.totalorder %s113, %s114
      %p126 = scmp.eq.s32.totalorder %s20, 3
      %p127 = por %p125, %p126
      %p129 = scmp.ne.s32.totalorder %s114, %s128
      %p130 = scmp.eq.s32.totalorder %s20, 0
      %p131 = por %p129, %p130
      %s132 = ssub.s32 %s14, %s21
      %p133 = scmp.eq.s32.totalorder %s132, 0
      %s135 = sadd.s32 %s134, 1
      %s136 = scalar_select %p133, %s134, %s135
      %p139 = pneg %p133
      %p140 = scmp.eq.s32.totalorder %s14, 3
      %p141 = por %p139, %p140
      %p142 = scmp.ne.s32.totalorder %s134, %s137
      %p143 = scmp.eq.s32.totalorder %s14, 0
      %p144 = por %p142, %p143
      %p145 = scmp.ne.s32.totalorder %s134, %s137
      %p146 = scmp.eq.s32.totalorder %s19, 3
      %p147 = por %p145, %p146
      %p148 = scmp.ne.s32.totalorder %s137, %s138
      %p149 = scmp.eq.s32.totalorder %s19, 0
      %p150 = por %p148, %p149
      %p151 = scmp.ne.s32.totalorder %s137, %s138
      %p152 = scmp.eq.s32.totalorder %s20, 3
      %p153 = por %p151, %p152
      %p155 = scmp.ne.s32.totalorder %s138, %s154
      %p156 = scmp.eq.s32.totalorder %s20, 0
      %p157 = por %p155, %p156
      %p158 = scmp.le.s32.totalorder 1, %s14
      %p159 = scmp.lt.s32.totalorder %s14, 5
      %p160 = pnand %p158, %p159
      %p161 = pneg %p160
      // Predicated region
      $region9: #{tpu_custom_call.1} parent=5 // pred_check
        _
      $region10: #{tpu_custom_call.1} parent=5 // pred_check_branch
        %163 = sbr.rel (%p160) target = $region12
      $region11: #{tpu_custom_call.1} parent=5 // pred_region
        %s164 = ssub.s32 %s14, 1
        // Predicated region
        $region13: #{tpu_custom_call.1} parent=11 // pred_check
          %p165 = pneg %p61
        $region14: #{tpu_custom_call.1} parent=11 // pred_check_branch
          %167 = sbr.rel (%p165) target = $region16
        $region15: #{tpu_custom_call.1} parent=11 // pred_region
          _
        $region16: #{tpu_custom_call.1} parent=11 // pred_fallthru
          _
        // Predicated region
        $region17: #{tpu_custom_call.1} parent=11 // pred_check
          %p168 = pneg %p82
        $region18: #{tpu_custom_call.1} parent=11 // pred_check_branch
          %170 = sbr.rel (%p168) target = $region20
        $region19: #{tpu_custom_call.1} parent=11 // pred_region
          _
        $region20: #{tpu_custom_call.1} parent=11 // pred_fallthru
          _
        // Predicated region
        $region21: #{tpu_custom_call.1} parent=11 // pred_check
          %p171 = pneg %p103
        $region22: #{tpu_custom_call.1} parent=11 // pred_check_branch
          %173 = sbr.rel (%p171) target = $region24
        $region23: #{tpu_custom_call.1} parent=11 // pred_region
          _
        $region24: #{tpu_custom_call.1} parent=11 // pred_fallthru
          _
        // Predicated region
        $region25: #{tpu_custom_call.1} parent=11 // pred_check
          %p174 = pneg %p124
        $region26: #{tpu_custom_call.1} parent=11 // pred_check_branch
          %176 = sbr.rel (%p174) target = $region28
        $region27: #{tpu_custom_call.1} parent=11 // pred_region
          _
        $region28: #{tpu_custom_call.1} parent=11 // pred_fallthru
          _
      $region12: #{tpu_custom_call.1} parent=5 // pred_fallthru
        _
      %p177 = scmp.lt.s32.totalorder %s14, 4
      // Predicated region
      $region29: #{tpu_custom_call.1} parent=5 // pred_check
        %p178 = pneg %p177
      $region30: #{tpu_custom_call.1} parent=5 // pred_check_branch
        %180 = sbr.rel (%p178) target = $region32
      $region31: #{tpu_custom_call.1} parent=5 // pred_region
        // Predicated region
        $region33: #{tpu_custom_call.1} parent=31 // pred_check
          %p181 = pneg %p34
        $region34: #{tpu_custom_call.1} parent=31 // pred_check_branch
          %183 = sbr.rel (%p181) target = $region36
        $region35: #{tpu_custom_call.1} parent=31 // pred_region
          %s184 = smul.u32 4, %s14
          %p185 = scmp.lt.s32.totalorder %s184, 15
          %s186 = scalar_select %p185, %s184, 15
          %s187 = smul.addr %s186, 8
          %s188 = scalar_lea.vmem %s0, %s187
          %s189 = smul.u32 4, %s14
        $region36: #{tpu_custom_call.1} parent=31 // pred_fallthru
          _
      $region32: #{tpu_custom_call.1} parent=5 // pred_fallthru
        _
      %p190 = scmp.le.s32.totalorder 1, %s14
      %p191 = scmp.lt.s32.totalorder %s14, 5
      %p192 = pnand %p190, %p191
      %p193 = pneg %p192
      // Predicated region
      $region37: #{tpu_custom_call.1} parent=5 // pred_check
        _
      $region38: #{tpu_custom_call.1} parent=5 // pred_check_branch
        %195 = sbr.rel (%p192) target = $region40
      $region39: #{tpu_custom_call.1} parent=5 // pred_region
        %s196 = ssub.s32 %s14, 1
        %s197 = smul.u32 4, %s19
        %p198 = scmp.lt.s32.totalorder %s197, 15
        %s199 = scalar_select %p198, %s197, 15
        %s200 = smul.addr %s199, 8
        %s201 = scalar_lea.vmem %s0, %s200
        %p202 = pneg %p40
        %p203 = pneg %p37
        %p204 = pneg %p61
        %p205 = pneg %p58
        %p206 = pneg %p82
        %p207 = pneg %p79
        %p208 = pneg %p103
        %p209 = pneg %p100
        %p210 = pneg %p124
        %p211 = pneg %p121
        %p212 = pneg %p150
        %p213 = pneg %p147
        %s214 = sand.u32 %s137, 1
        %s215 = scalar_lea.sflag [#allocation3], %s214
        %s216 = sand.u32 %s137, 1
        %s217 = smul.addr %s216, 32
        %s218 = scalar_lea.vmem [#allocation2], %s217
        %s219 = smul.u32 4, %s19
        %p220 = scmp.lt.s32.totalorder %s219, 15
        %s221 = scalar_select %p220, %s219, 15
        %s222 = smul.addr %s221, 8
        %s223 = scalar_lea.vmem %s0, %s222
        %s224 = smul.u32 4, %s19
        %s225 = smul.u32 4, %s19
        %v226 = vld [vmem:[%s223] sm:$0xff]
        %v227 = vld [vmem:[%s223 + $0x8] sm:$0xff]
        %v228 = vld [vmem:[%s223 + $0x10] sm:$0xff]
        %v229 = vld [vmem:[%s223 + $0x18] sm:$0xff]
        %v230 = vld [vmem:[%s1] sm:$0xff]
        %v231 = vld [vmem:[%s1 + $0x8] sm:$0xff]
        %v232 = vld [vmem:[%s1 + $0x10] sm:$0xff]
        %v233 = vld [vmem:[%s1 + $0x18] sm:$0xff]
        %v234 = vld [vmem:[%s2] sm:$0x1]
        %v236 = vlaneseq
        %v237 = vshrl.u32 %v236, 7
        %v238 = vsub.s32 0, %v237
        %v239 = vrot.slane %v234, %v238
        %vm241 = vcmask 261120
        %v243 = vsel %vm241, %v226, 0
        %v246 = vsel %vm241, %v227, 0
        %v249 = vsel %vm241, %v228, 0
        %v252 = vsel %vm241, %v229, 0
        %254 = vmatprep.subr.mxu0 0.0
        %255 = vmatpush1.msra.mxu0 %v230
        %256 = vmatprep.subr.mxu0 0.0
        %257 = vmatpush1.msra.mxu0 %v231
        %258 = vmatprep.subr.mxu0 0.0
        %259 = vmatpush1.msra.mxu0 %v232
        %260 = vmatprep.subr.mxu0 0.0
        %261 = vmatpush1.msra.mxu0 %v233
        %262 = vmatprep.subr.mxu0 0.0
        %263 = vmatpush1.msra.mxu0 0.0
        %264 = vmatprep.subr.mxu0 0.0
        %265 = vmatpush1.msra.mxu0 0.0
        %266 = vmatprep.subr.mxu0 0.0
        %267 = vmatpush1.msra.mxu0 0.0
        %268 = vmatprep.subr.mxu0 0.0
        %269 = vmatpush1.msra.mxu0 0.0
        %270 = vmatprep.subr.mxu0 0.0
        %271 = vmatpush1.msra.mxu0 0.0
        %272 = vmatprep.subr.mxu0 0.0
        %273 = vmatpush1.msra.mxu0 0.0
        %274 = vmatprep.subr.mxu0 0.0
        %275 = vmatpush1.msra.mxu0 0.0
        %276 = vmatprep.subr.mxu0 0.0
        %277 = vmatpush1.msra.mxu0 0.0
        %278 = vmatprep.subr.mxu0 0.0
        %279 = vmatpush1.msra.mxu0 0.0
        %280 = vmatprep.subr.mxu0 0.0
        %281 = vmatpush1.msra.mxu0 0.0
        %282 = vmatprep.subr.mxu0 0.0
        %283 = vmatpush1.msra.mxu0 0.0
        %284 = vmatprep.subr.mxu0 0.0
        %285 = vmatpush1.msra.mxu0 0.0
        %286 = vmatprep.subr.mxu0 0.0
        %287 = vmatpush1.msra.mxu0 0.0
        %288 = vmatprep.subr.mxu0 0.0
        %289 = vmatpush1.msra.mxu0 0.0
        %290 = vmatprep.subr.mxu0 0.0
        %291 = vmatpush1.msra.mxu0 0.0
        %292 = vmatprep.subr.mxu0 0.0
        %293 = vmatpush1.msra.mxu0 0.0
        %294 = vmatprep.subr.mxu0 0.0
        %295 = vmatpush1.msra.mxu0 0.0
        %296 = vmatprep.subr.mxu0 0.0
        %297 = vmatpush1.msra.mxu0 0.0
        %298 = vmatprep.subr.mxu0 0.0
        %299 = vmatpush1.msra.mxu0 0.0
        %300 = vmatprep.subr.mxu0 0.0
        %301 = vmatpush1.msra.mxu0 0.0
        %302 = vmatprep.subr.mxu0 0.0
        %303 = vmatpush1.msra.mxu0 0.0
        %304 = vmatprep.subr.mxu0 0.0
        %305 = vmatpush1.msra.mxu0 0.0
        %306 = vmatprep.subr.mxu0 0.0
        %307 = vmatpush1.msra.mxu0 0.0
        %308 = vmatprep.subr.mxu0 0.0
        %309 = vmatpush1.msra.mxu0 0.0
        %310 = vmatprep.subr.mxu0 0.0
        %311 = vmatpush1.msra.mxu0 0.0
        %312 = vmatprep.subr.mxu0 0.0
        %313 = vmatpush1.msra.mxu0 0.0
        %314 = vmatprep.subr.mxu0 0.0
        %315 = vmatpush1.msra.mxu0 0.0
        %316 = vmatprep.subr.mxu0 0.0
        %317 = vmatpush1.msra.mxu0 0.0
        %318 = vmatprep.mubr.f32.mxu0 0.0
        %319 = vmatmul.mubr.f32.gmra.mrb[0].mxu0 %v243
        %v320 = vpop.f32.mrb[0].mxu0
        %v321 = vadd.f32 %v239, %v320
        %v322 = vpop.f32.mrb[0].mxu0
        %323 = vmatprep.mubr.f32.mxu0 0.0
        %324 = vmatmul.mubr.f32.gmra.mrb[0].mxu0 %v246
        %v325 = vpop.f32.mrb[0].mxu0
        %v326 = vadd.f32 %v239, %v325
        %v327 = vpop.f32.mrb[0].mxu0
        %328 = vmatprep.mubr.f32.mxu0 0.0
        %329 = vmatmul.mubr.f32.gmra.mrb[0].mxu0 %v249
        %v330 = vpop.f32.mrb[0].mxu0
        %v331 = vadd.f32 %v239, %v330
        %v332 = vpop.f32.mrb[0].mxu0
        %333 = vmatprep.mubr.f32.mxu0 0.0
        %334 = vmatmul.mubr.f32.gmra.mrb[0].mxu0 %v252
        %v335 = vpop.f32.mrb[0].mxu0
        %v336 = vadd.f32 %v239, %v335
        %v337 = vpop.f32.mrb[0].mxu0
        %338 = vdwg.mxu0
        %v339 = vmax.f32 %v321, 0.0
        %v340 = vmax.f32 %v326, 0.0
        %v341 = vmax.f32 %v331, 0.0
        %v342 = vmax.f32 %v336, 0.0
        %v343 = vld [vmem:[%s3] sm:$0xff]
        %v344 = vld [vmem:[%s3 + $0x8] sm:$0xff]
        %v345 = vld [vmem:[%s3 + $0x10] sm:$0xff]
        %v346 = vld [vmem:[%s3 + $0x18] sm:$0xff]
        %v347 = vld [vmem:[%s4] sm:$0x1]
        %v349 = vlaneseq
        %v350 = vshrl.u32 %v349, 7
        %v351 = vsub.s32 0, %v350
        %v352 = vrot.slane %v347, %v351
        %v355 = vsel %vm241, %v339, 0
        %v358 = vsel %vm241, %v340, 0
        %v361 = vsel %vm241, %v341, 0
        %v364 = vsel %vm241, %v342, 0
        %366 = vmatprep.subr.mxu0 0.0
        %367 = vmatpush1.msra.mxu0 %v343
        %368 = vmatprep.subr.mxu0 0.0
        %369 = vmatpush1.msra.mxu0 %v344
        %370 = vmatprep.subr.mxu0 0.0
        %371 = vmatpush1.msra.mxu0 %v345
        %372 = vmatprep.subr.mxu0 0.0
        %373 = vmatpush1.msra.mxu0 %v346
        %374 = vmatprep.subr.mxu0 0.0
        %375 = vmatpush1.msra.mxu0 0.0
        %376 = vmatprep.subr.mxu0 0.0
        %377 = vmatpush1.msra.mxu0 0.0
        %378 = vmatprep.subr.mxu0 0.0
        %379 = vmatpush1.msra.mxu0 0.0
        %380 = vmatprep.subr.mxu0 0.0
        %381 = vmatpush1.msra.mxu0 0.0
        %382 = vmatprep.subr.mxu0 0.0
        %383 = vmatpush1.msra.mxu0 0.0
        %384 = vmatprep.subr.mxu0 0.0
        %385 = vmatpush1.msra.mxu0 0.0
        %386 = vmatprep.subr.mxu0 0.0
        %387 = vmatpush1.msra.mxu0 0.0
        %388 = vmatprep.subr.mxu0 0.0
        %389 = vmatpush1.msra.mxu0 0.0
        %390 = vmatprep.subr.mxu0 0.0
        %391 = vmatpush1.msra.mxu0 0.0
        %392 = vmatprep.subr.mxu0 0.0
        %393 = vmatpush1.msra.mxu0 0.0
        %394 = vmatprep.subr.mxu0 0.0
        %395 = vmatpush1.msra.mxu0 0.0
        %396 = vmatprep.subr.mxu0 0.0
        %397 = vmatpush1.msra.mxu0 0.0
        %398 = vmatprep.subr.mxu0 0.0
        %399 = vmatpush1.msra.mxu0 0.0
        %400 = vmatprep.subr.mxu0 0.0
        %401 = vmatpush1.msra.mxu0 0.0
        %402 = vmatprep.subr.mxu0 0.0
        %403 = vmatpush1.msra.mxu0 0.0
        %404 = vmatprep.subr.mxu0 0.0
        %405 = vmatpush1.msra.mxu0 0.0
        %406 = vmatprep.subr.mxu0 0.0
        %407 = vmatpush1.msra.mxu0 0.0
        %408 = vmatprep.subr.mxu0 0.0
        %409 = vmatpush1.msra.mxu0 0.0
        %410 = vmatprep.subr.mxu0 0.0
        %411 = vmatpush1.msra.mxu0 0.0
        %412 = vmatprep.subr.mxu0 0.0
        %413 = vmatpush1.msra.mxu0 0.0
        %414 = vmatprep.subr.mxu0 0.0
        %415 = vmatpush1.msra.mxu0 0.0
        %416 = vmatprep.subr.mxu0 0.0
        %417 = vmatpush1.msra.mxu0 0.0
        %418 = vmatprep.subr.mxu0 0.0
        %419 = vmatpush1.msra.mxu0 0.0
        %420 = vmatprep.subr.mxu0 0.0
        %421 = vmatpush1.msra.mxu0 0.0
        %422 = vmatprep.subr.mxu0 0.0
        %423 = vmatpush1.msra.mxu0 0.0
        %424 = vmatprep.subr.mxu0 0.0
        %425 = vmatpush1.msra.mxu0 0.0
        %426 = vmatprep.subr.mxu0 0.0
        %427 = vmatpush1.msra.mxu0 0.0
        %428 = vmatprep.subr.mxu0 0.0
        %429 = vmatpush1.msra.mxu0 0.0
        %430 = vmatprep.mubr.f32.mxu0 0.0
        %431 = vmatmul.mubr.f32.gmra.mrb[0].mxu0 %v355
        %v432 = vpop.f32.mrb[0].mxu0
        %v433 = vadd.f32 %v352, %v432
        %v434 = vpop.f32.mrb[0].mxu0
        %435 = vmatprep.mubr.f32.mxu0 0.0
        %436 = vmatmul.mubr.f32.gmra.mrb[0].mxu0 %v358
        %v437 = vpop.f32.mrb[0].mxu0
        %v438 = vadd.f32 %v352, %v437
        %v439 = vpop.f32.mrb[0].mxu0
        %440 = vmatprep.mubr.f32.mxu0 0.0
        %441 = vmatmul.mubr.f32.gmra.mrb[0].mxu0 %v361
        %v442 = vpop.f32.mrb[0].mxu0
        %v443 = vadd.f32 %v352, %v442
        %v444 = vpop.f32.mrb[0].mxu0
        %445 = vmatprep.mubr.f32.mxu0 0.0
        %446 = vmatmul.mubr.f32.gmra.mrb[0].mxu0 %v364
        %v447 = vpop.f32.mrb[0].mxu0
        %v448 = vadd.f32 %v352, %v447
        %v449 = vpop.f32.mrb[0].mxu0
        %450 = vdwg.mxu0
        %451 = vst [vmem:[%s218] sm:$0xff] %v433
        %452 = vst [vmem:[%s218 + $0x8] sm:$0xff] %v438
        %453 = vst [vmem:[%s218 + $0x10] sm:$0xff] %v443
        %454 = vst [vmem:[%s218 + $0x18] sm:$0xff] %v448
        %s455 = sand.u32 %s137, 1
        %s456 = scalar_lea.sflag [#allocation3], %s455
        %s457 = sand.u32 %s137, 1
        %s458 = smul.addr %s457, 32
        %s459 = scalar_lea.vmem [#allocation2], %s458
        // Predicated region
        $region41: #{tpu_custom_call.1} parent=39 // pred_check
          %p460 = pneg %p147
        $region42: #{tpu_custom_call.1} parent=39 // pred_check_branch
          %462 = sbr.rel (%p460) target = $region44
        $region43: #{tpu_custom_call.1} parent=39 // pred_region
          %s463 = smul.u32 4, %s19
          %s465 = ssub.s32 512, 512
          %466 = vsyncadd %s456, %s465
          %s467 = smul.addr %s463, 128
          %s468 = scalar_lea.hbm %s5, %s467
          %s469 = sshll.u32 %s459, 4
          %s470 = int_to_ptr.vmem [resolvable:$true] %s469
          %475 = dma.vmem_to_hbm [thread:$0]  %s470, 512, %s468, %s456, 128, 128, 8
        $region44: #{tpu_custom_call.1} parent=39 // pred_fallthru
          _
      $region40: #{tpu_custom_call.1} parent=5 // pred_fallthru
        _
      %p476 = scmp.le.s32.totalorder 2, %s14
      // Predicated region
      $region45: #{tpu_custom_call.1} parent=5 // pred_check
        %p477 = pneg %p476
      $region46: #{tpu_custom_call.1} parent=5 // pred_check_branch
        %479 = sbr.rel (%p477) target = $region48
      $region47: #{tpu_custom_call.1} parent=5 // pred_region
        %s480 = ssub.s32 %s14, 2
        // Predicated region
        $region49: #{tpu_custom_call.1} parent=47 // pred_check
          %p481 = pneg %p153
        $region50: #{tpu_custom_call.1} parent=47 // pred_check_branch
          %483 = sbr.rel (%p481) target = $region52
        $region51: #{tpu_custom_call.1} parent=47 // pred_region
          %s484 = sand.u32 %s138, 1
          %s485 = scalar_lea.sflag [#allocation3], %s484
          %s486 = sand.u32 %s138, 1
          %s487 = smul.addr %s486, 32
          %s488 = scalar_lea.vmem [#allocation2], %s487
          %489 = dma.done %s485, 512
        $region52: #{tpu_custom_call.1} parent=47 // pred_fallthru
          _
      $region48: #{tpu_custom_call.1} parent=5 // pred_fallthru
        _
    $region6: #{tpu_custom_call.1} parent=1 // loop_footer
      %s18 = sadd.s32 1, %s14
    $region7: #{tpu_custom_call.1} parent=1 // loop_footer_branch
      %13 = sbr.rel target = $region3
    $region8: #{tpu_custom_call.1} parent=1 // loop_exit
      _
    %490 = vsyncpa [#allocation3], 1
    %s491 = scalar_lea.sflag [#allocation3], 1
    %492 = vsyncpa %s491, 1

</llo_original>
